<compile_context>
chip_gen: v7x
topology: tpu7x:2x2x1
jax: 0.10.0
libtpu: 0.0.40
codegen_flags: <defaults>
</compile_context>

<pallas_src>
import numpy as np
import jax
import jax.numpy as jnp
from jax import lax
from jax.experimental import pallas as pl
from jax.experimental.pallas import tpu as pltpu

LN_EPS = 1e-12   # matches the PyTorch LayerNorm in the spec


# ---------------- math helpers (pure jnp; usable inside the kernel) ----------------
def _layernorm(x, w, b):
    mu = jnp.mean(x, axis=-1, keepdims=True)
    var = jnp.mean((x - mu) ** 2, axis=-1, keepdims=True)
    return (x - mu) * lax.rsqrt(var + LN_EPS) * w + b


def ffn_sublayer(h, w1, b1, w2, b2):
    """Position-wise feed-forward sublayer (Linear -> GELU -> Linear).

    Weight matrices arrive pre-cast (e.g. bf16) from the caller; only the
    activations are cast at the MXU boundary.  f32 accumulation throughout.
    """
    h1 = jnp.dot(h.astype(w1.dtype), w1, preferred_element_type=jnp.float32) + b1
    # TODO(synk): PyTorch nn.GELU defaults to exact erf; tanh approximation kept
    #             here (sublayer is caller-supplied, not part of the spec module).
    h1 = jax.nn.gelu(h1)
    return jnp.dot(h1.astype(w2.dtype), w2, preferred_element_type=jnp.float32) + b2


# ---------------- Pallas kernel + wrapper ----------------
def make_sublayer_connection(sublayer_fn, *, row_tile=128):
    """Returns apply(x(B,L,H), ln_w(H,), ln_b(H,), *sublayer_params) -> (B,L,H).

    sublayer_fn(h_rows_f32, *params) must be a row-wise (position-wise) jnp
    function returning an array of the same (rows, H) shape.  All sublayer
    params must be 2-D arrays (reshape biases to (1, N)); matmul weights should
    be pre-cast to bf16 by the caller for best DMA / VMEM behaviour.
    """

    def kernel(x_ref, ln_w_ref, ln_b_ref, *rest):
        *param_refs, o_ref = rest
        x = x_ref[...].astype(jnp.float32)                      # (tm, H)
        h = _layernorm(x, ln_w_ref[...], ln_b_ref[...])         # LayerNorm(x), eps=1e-12
        y = sublayer_fn(h, *[r[...] for r in param_refs])       # sublayer(norm(x))
        # dropout -> identity (eval mode)
        o_ref[...] = (x + y).astype(o_ref.dtype)                # residual add

    def apply(x, ln_w, ln_b, *sublayer_params):
        B, L, H = x.shape
        rows = B * L
        x2 = x.reshape(rows, H)                     # free: contiguous reshape, no copy

        # --- row-tile selection -------------------------------------------------
        rows8 = ((rows + 7) // 8) * 8               # rows rounded up to sublane size
        tm = min(row_tile, rows8)
        if tm == rows8 and rows8 >= 16:             # force >= 2 grid steps so the
            tm = ((rows8 // 2 + 7) // 8) * 8        # parallel axis uses both v7x TCs
        if tm > rows:                               # block may not exceed the array:
            tm = rows                               # use the full extent instead
        grid = (pl.cdiv(rows, tm),)                 # ragged tail -> Pallas-masked
                                                    # partial last block (no host pad)

        # --- operands -----------------------------------------------------------
        weights = [ln_w.reshape(1, H).astype(jnp.float32),
                   ln_b.reshape(1, H).astype(jnp.float32)]
        weights += [jnp.asarray(p) for p in sublayer_params]    # dtype passed through
                                                                # (caller pre-casts bf16)

        in_specs = [pl.BlockSpec((tm, H), lambda i: (i, 0))]
        for w in weights:
            assert w.ndim == 2, "sublayer params must be 2-D (reshape biases to (1, N))"
            # constant index_map -> DMA'd once; single-buffered halves weight VMEM
            in_specs.append(pl.BlockSpec(w.shape, lambda i: (0, 0),
                                         pipeline_mode=pl.Buffered(1)))

        # --- VMEM budget + advisory cost estimate --------------------------------
        itemsize = x.dtype.itemsize
        act_bytes = 2 * 2 * tm * H * itemsize       # x-in + out tiles, double-buffered
        wt_bytes = sum(int(w.size) * w.dtype.itemsize for w in weights)
        vmem_limit = int(min(64 * 2**20,            # valid on v7x (64 MiB physical)
                             max(16 * 2**20, 4 * (act_bytes + wt_bytes))))

        flops = 10 * rows * H                       # LayerNorm + residual (rough)
        transcendentals = 0
        bytes_accessed = 2 * rows * H * itemsize + wt_bytes
        for w in weights[2:]:
            if w.shape[0] > 1 and w.shape[1] > 1:   # matmul weight
                flops += 2 * rows * int(w.shape[0]) * int(w.shape[1])
                transcendentals += rows * int(w.shape[1])

        out2 = pl.pallas_call(
            kernel,
            out_shape=jax.ShapeDtypeStruct((rows, H), x.dtype),
            grid_spec=pltpu.PrefetchScalarGridSpec(
                num_scalar_prefetch=0,
                grid=grid,
                in_specs=in_specs,
                out_specs=pl.BlockSpec((tm, H), lambda i: (i, 0)),
            ),
            compiler_params=pltpu.CompilerParams(
                dimension_semantics=("parallel",),   # row tiles shard across v7x TCs
                vmem_limit_bytes=vmem_limit),
            cost_estimate=pl.CostEstimate(
                flops=int(flops),
                transcendentals=int(transcendentals),
                bytes_accessed=int(bytes_accessed)),
        )(x2, *weights)

        return out2.reshape(B, L, H)

    return apply


# ---------------- pure-JAX reference (for validation) ----------------
def reference(x, ln_w, ln_b, sublayer_fn, sublayer_params):
    B, L, H = x.shape
    xr = x.reshape(B * L, H).astype(jnp.float32)
    h = _layernorm(xr, ln_w.reshape(1, H).astype(jnp.float32),
                   ln_b.reshape(1, H).astype(jnp.float32))
    y = sublayer_fn(h, *sublayer_params)
    return (xr + y).reshape(B, L, H).astype(x.dtype)


# ---------------- main ----------------
if __name__ == "__main__":
    B, L, H = 2, 8, 32          # batch, sequence, hidden_size
    FF = 4 * H                  # feed-forward width of the demo sublayer

    key = jax.random.PRNGKey(0)
    k = jax.random.split(key, 5)

    x = jax.random.normal(k[0], (B, L, H), dtype=jnp.float32)
    ln_w = jnp.ones((H,), jnp.float32)
    ln_b = jnp.zeros((H,), jnp.float32)
    # matmul weights pre-cast to bf16 once here (halves weight DMA + VMEM and
    # removes the per-grid-step cast inside the kernel); biases stay f32.
    w1 = (jax.random.normal(k[1], (H, FF), jnp.float32) / np.sqrt(H)).astype(jnp.bfloat16)
    b1 = jax.random.normal(k[2], (1, FF), jnp.float32) * 0.1
    w2 = (jax.random.normal(k[3], (FF, H), jnp.float32) / np.sqrt(FF)).astype(jnp.bfloat16)
    b2 = jax.random.normal(k[4], (1, H), jnp.float32) * 0.1

    sublayer_connection = make_sublayer_connection(ffn_sublayer)
    out = sublayer_connection(x, ln_w, ln_b, w1, b1, w2, b2)
    out = jax.block_until_ready(out)

    ref = reference(x, ln_w, ln_b, ffn_sublayer, (w1, b1, w2, b2))
    np.testing.assert_allclose(np.asarray(out), np.asarray(ref), atol=1e-2, rtol=1e-2)

    print("KERNEL_OK")
</pallas_src>

<mosaic_0001>
module attributes {stable_mosaic.version = 11 : i64} {
  func.func @kernel(%arg0: i32, %arg1: memref<8x32xf32, #tpu.memory_space<vmem>>, %arg2: memref<1x32xf32, #tpu.memory_space<vmem>>, %arg3: memref<1x32xf32, #tpu.memory_space<vmem>>, %arg4: memref<32x128xbf16, #tpu.memory_space<vmem>>, %arg5: memref<1x128xf32, #tpu.memory_space<vmem>>, %arg6: memref<128x32xbf16, #tpu.memory_space<vmem>>, %arg7: memref<1x32xf32, #tpu.memory_space<vmem>>, %arg8: memref<8x32xf32, #tpu.memory_space<vmem>>) attributes {dimension_semantics = [#tpu.dimension_semantics<parallel>], iteration_bounds = array<i64: 2>, scalar_prefetch = 0 : i64, scratch_operands = 0 : i64, tpu.core_type = #tpu.core_type<tc>, window_params = [{transform_indices = @transform_0, window_bounds = array<i64: 8, 32>}, {pipeline_mode = #tpu.pipeline_mode<synchronous>, transform_indices = @transform_1, window_bounds = array<i64: 1, 32>}, {pipeline_mode = #tpu.pipeline_mode<synchronous>, transform_indices = @transform_2, window_bounds = array<i64: 1, 32>}, {pipeline_mode = #tpu.pipeline_mode<synchronous>, transform_indices = @transform_3, window_bounds = array<i64: 32, 128>}, {pipeline_mode = #tpu.pipeline_mode<synchronous>, transform_indices = @transform_4, window_bounds = array<i64: 1, 128>}, {pipeline_mode = #tpu.pipeline_mode<synchronous>, transform_indices = @transform_5, window_bounds = array<i64: 128, 32>}, {pipeline_mode = #tpu.pipeline_mode<synchronous>, transform_indices = @transform_6, window_bounds = array<i64: 1, 32>}, {transform_indices = @transform_7, window_bounds = array<i64: 8, 32>}]} {
    %c0 = arith.constant 0 : index
    %c0_0 = arith.constant 0 : index
    %0 = vector.load %arg1[%c0, %c0_0] : memref<8x32xf32, #tpu.memory_space<vmem>>, vector<8x32xf32>
    %c0_1 = arith.constant 0 : index
    %c0_2 = arith.constant 0 : index
    %1 = vector.load %arg2[%c0_1, %c0_2] : memref<1x32xf32, #tpu.memory_space<vmem>>, vector<1x32xf32>
    %c0_3 = arith.constant 0 : index
    %c0_4 = arith.constant 0 : index
    %2 = vector.load %arg3[%c0_3, %c0_4] : memref<1x32xf32, #tpu.memory_space<vmem>>, vector<1x32xf32>
    %cst = arith.constant dense<0.000000e+00> : vector<8xf32>
    %3 = vector.multi_reduction <add>, %0, %cst [1] : vector<8x32xf32> to vector<8xf32>
    %4 = vector.shape_cast %3 : vector<8xf32> to vector<8x1xf32>
    %cst_5 = arith.constant 3.200000e+01 : f32
    %5 = vector.broadcast %cst_5 : f32 to vector<8x1xf32>
    %6 = arith.divf %4, %5 : vector<8x1xf32>
    %7 = vector.broadcast %6 : vector<8x1xf32> to vector<8x32xf32>
    %8 = arith.subf %0, %7 : vector<8x32xf32>
    %9 = arith.mulf %8, %8 : vector<8x32xf32>
    %cst_6 = arith.constant dense<0.000000e+00> : vector<8xf32>
    %10 = vector.multi_reduction <add>, %9, %cst_6 [1] : vector<8x32xf32> to vector<8xf32>
    %11 = vector.shape_cast %10 : vector<8xf32> to vector<8x1xf32>
    %cst_7 = arith.constant 3.200000e+01 : f32
    %12 = vector.broadcast %cst_7 : f32 to vector<8x1xf32>
    %13 = arith.divf %11, %12 : vector<8x1xf32>
    %14 = vector.broadcast %6 : vector<8x1xf32> to vector<8x32xf32>
    %15 = arith.subf %0, %14 : vector<8x32xf32>
    %cst_8 = arith.constant 9.99999996E-13 : f32
    %16 = vector.broadcast %cst_8 : f32 to vector<8x1xf32>
    %17 = arith.addf %13, %16 : vector<8x1xf32>
    %18 = math.rsqrt %17 : vector<8x1xf32>
    %19 = vector.broadcast %18 : vector<8x1xf32> to vector<8x32xf32>
    %20 = arith.mulf %15, %19 : vector<8x32xf32>
    %21 = vector.broadcast %1 : vector<1x32xf32> to vector<8x32xf32>
    %22 = arith.mulf %20, %21 : vector<8x32xf32>
    %23 = vector.broadcast %2 : vector<1x32xf32> to vector<8x32xf32>
    %24 = arith.addf %22, %23 : vector<8x32xf32>
    %c0_9 = arith.constant 0 : index
    %c0_10 = arith.constant 0 : index
    %25 = vector.load %arg4[%c0_9, %c0_10] : memref<32x128xbf16, #tpu.memory_space<vmem>>, vector<32x128xbf16>
    %c0_11 = arith.constant 0 : index
    %c0_12 = arith.constant 0 : index
    %26 = vector.load %arg5[%c0_11, %c0_12] : memref<1x128xf32, #tpu.memory_space<vmem>>, vector<1x128xf32>
    %c0_13 = arith.constant 0 : index
    %c0_14 = arith.constant 0 : index
    %27 = vector.load %arg6[%c0_13, %c0_14] : memref<128x32xbf16, #tpu.memory_space<vmem>>, vector<128x32xbf16>
    %c0_15 = arith.constant 0 : index
    %c0_16 = arith.constant 0 : index
    %28 = vector.load %arg7[%c0_15, %c0_16] : memref<1x32xf32, #tpu.memory_space<vmem>>, vector<1x32xf32>
    %29 = arith.truncf %24 : vector<8x32xf32> to vector<8x32xbf16>
    %cst_17 = arith.constant dense<0.000000e+00> : vector<8x128xf32>
    %30 = tpu.matmul %29, %25, %cst_17 {dimension_numbers = #tpu.dot_dimension_numbers<[1], [0], [0], [1], [0, 0, 1, 1], [], []>} : vector<8x32xbf16>, vector<32x128xbf16>, vector<8x128xf32> -> vector<8x128xf32>
    %31 = vector.broadcast %26 : vector<1x128xf32> to vector<8x128xf32>
    %32 = arith.addf %30, %31 : vector<8x128xf32>
    %33 = arith.mulf %32, %32 : vector<8x128xf32>
    %34 = arith.mulf %32, %33 : vector<8x128xf32>
    %cst_18 = arith.constant 4.471500e-02 : f32
    %35 = vector.broadcast %cst_18 : f32 to vector<8x128xf32>
    %36 = arith.mulf %35, %34 : vector<8x128xf32>
    %37 = arith.addf %32, %36 : vector<8x128xf32>
    %cst_19 = arith.constant 0.797884583 : f32
    %38 = vector.broadcast %cst_19 : f32 to vector<8x128xf32>
    %39 = arith.mulf %38, %37 : vector<8x128xf32>
    %40 = math.tanh %39 : vector<8x128xf32>
    %cst_20 = arith.constant 1.000000e+00 : f32
    %41 = vector.broadcast %cst_20 : f32 to vector<8x128xf32>
    %42 = arith.addf %41, %40 : vector<8x128xf32>
    %cst_21 = arith.constant 5.000000e-01 : f32
    %43 = vector.broadcast %cst_21 : f32 to vector<8x128xf32>
    %44 = arith.mulf %43, %42 : vector<8x128xf32>
    %45 = arith.mulf %32, %44 : vector<8x128xf32>
    %46 = arith.truncf %45 : vector<8x128xf32> to vector<8x128xbf16>
    %cst_22 = arith.constant dense<0.000000e+00> : vector<8x32xf32>
    %47 = tpu.matmul %46, %27, %cst_22 {dimension_numbers = #tpu.dot_dimension_numbers<[1], [0], [0], [1], [0, 0, 1, 1], [], []>} : vector<8x128xbf16>, vector<128x32xbf16>, vector<8x32xf32> -> vector<8x32xf32>
    %48 = vector.broadcast %28 : vector<1x32xf32> to vector<8x32xf32>
    %49 = arith.addf %47, %48 : vector<8x32xf32>
    %50 = arith.addf %0, %49 : vector<8x32xf32>
    %c0_23 = arith.constant 0 : index
    %c0_24 = arith.constant 0 : index
    %51 = vector.load %arg8[%c0_23, %c0_24] : memref<8x32xf32, #tpu.memory_space<vmem>>, vector<8x32xf32>
    tpu.vector_store %arg8[%c0_23, %c0_24], %50 {strides = array<i32>} : memref<8x32xf32, #tpu.memory_space<vmem>>, vector<8x32xf32>,
    return
  }
  func.func @transform_0(%arg0: i32) -> (i32, i32) {
    %c0_i32 = arith.constant 0 : i32
    %c0_i32_0 = arith.constant 0 : i32
    return %arg0, %c0_i32 : i32, i32
  }
  func.func @transform_1(%arg0: i32) -> (i32, i32) {
    %c0_i32 = arith.constant 0 : i32
    %c0_i32_0 = arith.constant 0 : i32
    %c0_i32_1 = arith.constant 0 : i32
    return %c0_i32, %c0_i32_0 : i32, i32
  }
  func.func @transform_2(%arg0: i32) -> (i32, i32) {
    %c0_i32 = arith.constant 0 : i32
    %c0_i32_0 = arith.constant 0 : i32
    %c0_i32_1 = arith.constant 0 : i32
    return %c0_i32, %c0_i32_0 : i32, i32
  }
  func.func @transform_3(%arg0: i32) -> (i32, i32) {
    %c0_i32 = arith.constant 0 : i32
    %c0_i32_0 = arith.constant 0 : i32
    %c0_i32_1 = arith.constant 0 : i32
    return %c0_i32, %c0_i32_0 : i32, i32
  }
  func.func @transform_4(%arg0: i32) -> (i32, i32) {
    %c0_i32 = arith.constant 0 : i32
    %c0_i32_0 = arith.constant 0 : i32
    %c0_i32_1 = arith.constant 0 : i32
    return %c0_i32, %c0_i32_0 : i32, i32
  }
  func.func @transform_5(%arg0: i32) -> (i32, i32) {
    %c0_i32 = arith.constant 0 : i32
    %c0_i32_0 = arith.constant 0 : i32
    %c0_i32_1 = arith.constant 0 : i32
    return %c0_i32, %c0_i32_0 : i32, i32
  }
  func.func @transform_6(%arg0: i32) -> (i32, i32) {
    %c0_i32 = arith.constant 0 : i32
    %c0_i32_0 = arith.constant 0 : i32
    %c0_i32_1 = arith.constant 0 : i32
    return %c0_i32, %c0_i32_0 : i32, i32
  }
  func.func @transform_7(%arg0: i32) -> (i32, i32) {
    %c0_i32 = arith.constant 0 : i32
    %c0_i32_0 = arith.constant 0 : i32
    return %arg0, %c0_i32 : i32, i32
  }
}

</mosaic_0001>

<llo_original>
// kernel: tpu_custom_call.1
$region0: #{tpu_custom_call.1}
  #allocation0 [shape = 'u32[]', space=smem, size = 0x4, offset = 0x4, fixed_abs, tag = 'smem constant byte address 0x4 - core index']
  #allocation1 [shape = 'u32[144,128]{1,0:T(1,128)}', space=vmem, size = 0x12000, scoped, tag = 'internal scratch']
  %s0 = inlined_call_operand.vmem [shape: f32[16,32], index: 0, kind: input, shape index: {}]
  %s1 = inlined_call_operand.vmem [shape: f32[1,32], index: 1, kind: input, shape index: {}]
  %s2 = inlined_call_operand.vmem [shape: f32[1,32], index: 2, kind: input, shape index: {}]
  %s3 = inlined_call_operand.vmem [shape: bf16[32,128], index: 3, kind: input, shape index: {}]
  %s4 = inlined_call_operand.vmem [shape: f32[1,128], index: 4, kind: input, shape index: {}]
  %s5 = inlined_call_operand.vmem [shape: bf16[128,32], index: 5, kind: input, shape index: {}]
  %s6 = inlined_call_operand.vmem [shape: f32[1,32], index: 6, kind: input, shape index: {}]
  %s7 = inlined_call_operand.hbm [shape: f32[16,32], index: 7, kind: output, shape index: {}]
  %s8 = sld [smem:[#allocation0]]
  $region61: #{tpu_custom_call.1} parent=0
    _
  %s10 = ssub.s32 1, %s8
  %s11 = scalar_select 0, %s10, %s8
  $region1: #{tpu_custom_call.1} parent=0
    #allocation2 [shape = 'u8[8192]{0}', space=vmem, size = 0x2000, scoped, tag = 'output window, operand 0']
    #allocation3 [shape = 's32[2]{0}', space=sflag, size = 0x8, scoped, tag = 'scoped memory for tpu_custom_call.1']
    %12 = vsyncpa [#allocation3], 0
    %s13 = scalar_lea.sflag [#allocation3], 1
    %14 = vsyncpa %s13, 0
    loop: start=0, step=1, limit=4
    $region2: #{tpu_custom_call.1} parent=1 // loop_pre_header
      _
    $region3: #{tpu_custom_call.1} parent=1 // loop_header
      %s16 = sphi 0, %s20
      %p17 = scmp.ge.s32.totalorder %s16, 4
      %s26 = sphi 0, %s28
      %s29 = sphi 0, %s26
      %s30 = sphi 0, %s29
      %s46 = sphi 0, %s30
      %s50 = sphi 0, %s50
      %s52 = sphi 0, %s50
      %s53 = sphi 0, %s52
      %s67 = sphi 0, %s53
      %s71 = sphi 0, %s71
      %s73 = sphi 0, %s71
      %s74 = sphi 0, %s73
      %s88 = sphi 0, %s74
      %s92 = sphi 0, %s92
      %s94 = sphi 0, %s92
      %s95 = sphi 0, %s94
      %s109 = sphi 0, %s95
      %s113 = sphi 0, %s113
      %s115 = sphi 0, %s113
      %s116 = sphi 0, %s115
      %s130 = sphi 0, %s116
      %s134 = sphi 0, %s134
      %s136 = sphi 0, %s134
      %s137 = sphi 0, %s136
      %s151 = sphi 0, %s137
      %s155 = sphi 0, %s155
      %s157 = sphi 0, %s155
      %s158 = sphi 0, %s157
      %s172 = sphi 0, %s158
      %s178 = sphi 0, %s180
      %s181 = sphi 0, %s178
      %s182 = sphi 0, %s181
      %s198 = sphi 0, %s182
    $region4: #{tpu_custom_call.1} parent=1 // loop_header_branch
      %19 = sbr.rel (%p17) target = $region8
    $region5: #{tpu_custom_call.1} parent=1 // loop_body
      %s21 = ssub.s32 %s16, 1
      %s22 = ssub.s32 %s16, 2
      %s23 = sadd.s32 %s16, 1
      %s24 = ssub.s32 %s16, %s23
      %p25 = scmp.eq.s32.totalorder %s24, 0
      %s27 = sadd.s32 %s26, 1
      %s28 = scalar_select %p25, %s26, %s27
      %p31 = pneg %p25
      %p32 = scmp.eq.s32.totalorder %s16, 1
      %p33 = por %p31, %p32
      %p34 = scmp.ne.s32.totalorder %s26, %s29
      %p35 = scmp.eq.s32.totalorder %s16, 0
      %p36 = por %p34, %p35
      %p37 = scmp.ne.s32.totalorder %s26, %s29
      %p38 = scmp.eq.s32.totalorder %s21, 1
      %p39 = por %p37, %p38
      %p40 = scmp.ne.s32.totalorder %s29, %s30
      %p41 = scmp.eq.s32.totalorder %s21, 0
      %p42 = por %p40, %p41
      %p43 = scmp.ne.s32.totalorder %s29, %s30
      %p44 = scmp.eq.s32.totalorder %s22, 1
      %p45 = por %p43, %p44
      %p47 = scmp.ne.s32.totalorder %s30, %s46
      %p48 = scmp.eq.s32.totalorder %s22, 0
      %p49 = por %p47, %p48
      %s51 = sadd.s32 %s50, 1
      %p54 = scmp.eq.s32.totalorder %s16, 1
      %p55 = scmp.ne.s32.totalorder %s50, %s52
      %p56 = scmp.eq.s32.totalorder %s16, 0
      %p57 = por %p55, %p56
      %p58 = scmp.ne.s32.totalorder %s50, %s52
      %p59 = scmp.eq.s32.totalorder %s21, 1
      %p60 = por %p58, %p59
      %p61 = scmp.ne.s32.totalorder %s52, %s53
      %p62 = scmp.eq.s32.totalorder %s21, 0
      %p63 = por %p61, %p62
      %p64 = scmp.ne.s32.totalorder %s52, %s53
      %p65 = scmp.eq.s32.totalorder %s22, 1
      %p66 = por %p64, %p65
      %p68 = scmp.ne.s32.totalorder %s53, %s67
      %p69 = scmp.eq.s32.totalorder %s22, 0
      %p70 = por %p68, %p69
      %s72 = sadd.s32 %s71, 1
      %p75 = scmp.eq.s32.totalorder %s16, 1
      %p76 = scmp.ne.s32.totalorder %s71, %s73
      %p77 = scmp.eq.s32.totalorder %s16, 0
      %p78 = por %p76, %p77
      %p79 = scmp.ne.s32.totalorder %s71, %s73
      %p80 = scmp.eq.s32.totalorder %s21, 1
      %p81 = por %p79, %p80
      %p82 = scmp.ne.s32.totalorder %s73, %s74
      %p83 = scmp.eq.s32.totalorder %s21, 0
      %p84 = por %p82, %p83
      %p85 = scmp.ne.s32.totalorder %s73, %s74
      %p86 = scmp.eq.s32.totalorder %s22, 1
      %p87 = por %p85, %p86
      %p89 = scmp.ne.s32.totalorder %s74, %s88
      %p90 = scmp.eq.s32.totalorder %s22, 0
      %p91 = por %p89, %p90
      %s93 = sadd.s32 %s92, 1
      %p96 = scmp.eq.s32.totalorder %s16, 1
      %p97 = scmp.ne.s32.totalorder %s92, %s94
      %p98 = scmp.eq.s32.totalorder %s16, 0
      %p99 = por %p97, %p98
      %p100 = scmp.ne.s32.totalorder %s92, %s94
      %p101 = scmp.eq.s32.totalorder %s21, 1
      %p102 = por %p100, %p101
      %p103 = scmp.ne.s32.totalorder %s94, %s95
      %p104 = scmp.eq.s32.totalorder %s21, 0
      %p105 = por %p103, %p104
      %p106 = scmp.ne.s32.totalorder %s94, %s95
      %p107 = scmp.eq.s32.totalorder %s22, 1
      %p108 = por %p106, %p107
      %p110 = scmp.ne.s32.totalorder %s95, %s109
      %p111 = scmp.eq.s32.totalorder %s22, 0
      %p112 = por %p110, %p111
      %s114 = sadd.s32 %s113, 1
      %p117 = scmp.eq.s32.totalorder %s16, 1
      %p118 = scmp.ne.s32.totalorder %s113, %s115
      %p119 = scmp.eq.s32.totalorder %s16, 0
      %p120 = por %p118, %p119
      %p121 = scmp.ne.s32.totalorder %s113, %s115
      %p122 = scmp.eq.s32.totalorder %s21, 1
      %p123 = por %p121, %p122
      %p124 = scmp.ne.s32.totalorder %s115, %s116
      %p125 = scmp.eq.s32.totalorder %s21, 0
      %p126 = por %p124, %p125
      %p127 = scmp.ne.s32.totalorder %s115, %s116
      %p128 = scmp.eq.s32.totalorder %s22, 1
      %p129 = por %p127, %p128
      %p131 = scmp.ne.s32.totalorder %s116, %s130
      %p132 = scmp.eq.s32.totalorder %s22, 0
      %p133 = por %p131, %p132
      %s135 = sadd.s32 %s134, 1
      %p138 = scmp.eq.s32.totalorder %s16, 1
      %p139 = scmp.ne.s32.totalorder %s134, %s136
      %p140 = scmp.eq.s32.totalorder %s16, 0
      %p141 = por %p139, %p140
      %p142 = scmp.ne.s32.totalorder %s134, %s136
      %p143 = scmp.eq.s32.totalorder %s21, 1
      %p144 = por %p142, %p143
      %p145 = scmp.ne.s32.totalorder %s136, %s137
      %p146 = scmp.eq.s32.totalorder %s21, 0
      %p147 = por %p145, %p146
      %p148 = scmp.ne.s32.totalorder %s136, %s137
      %p149 = scmp.eq.s32.totalorder %s22, 1
      %p150 = por %p148, %p149
      %p152 = scmp.ne.s32.totalorder %s137, %s151
      %p153 = scmp.eq.s32.totalorder %s22, 0
      %p154 = por %p152, %p153
      %s156 = sadd.s32 %s155, 1
      %p159 = scmp.eq.s32.totalorder %s16, 1
      %p160 = scmp.ne.s32.totalorder %s155, %s157
      %p161 = scmp.eq.s32.totalorder %s16, 0
      %p162 = por %p160, %p161
      %p163 = scmp.ne.s32.totalorder %s155, %s157
      %p164 = scmp.eq.s32.totalorder %s21, 1
      %p165 = por %p163, %p164
      %p166 = scmp.ne.s32.totalorder %s157, %s158
      %p167 = scmp.eq.s32.totalorder %s21, 0
      %p168 = por %p166, %p167
      %p169 = scmp.ne.s32.totalorder %s157, %s158
      %p170 = scmp.eq.s32.totalorder %s22, 1
      %p171 = por %p169, %p170
      %p173 = scmp.ne.s32.totalorder %s158, %s172
      %p174 = scmp.eq.s32.totalorder %s22, 0
      %p175 = por %p173, %p174
      %s176 = ssub.s32 %s16, %s23
      %p177 = scmp.eq.s32.totalorder %s176, 0
      %s179 = sadd.s32 %s178, 1
      %s180 = scalar_select %p177, %s178, %s179
      %p183 = pneg %p177
      %p184 = scmp.eq.s32.totalorder %s16, 1
      %p185 = por %p183, %p184
      %p186 = scmp.ne.s32.totalorder %s178, %s181
      %p187 = scmp.eq.s32.totalorder %s16, 0
      %p188 = por %p186, %p187
      %p189 = scmp.ne.s32.totalorder %s178, %s181
      %p190 = scmp.eq.s32.totalorder %s21, 1
      %p191 = por %p189, %p190
      %p192 = scmp.ne.s32.totalorder %s181, %s182
      %p193 = scmp.eq.s32.totalorder %s21, 0
      %p194 = por %p192, %p193
      %p195 = scmp.ne.s32.totalorder %s181, %s182
      %p196 = scmp.eq.s32.totalorder %s22, 1
      %p197 = por %p195, %p196
      %p199 = scmp.ne.s32.totalorder %s182, %s198
      %p200 = scmp.eq.s32.totalorder %s22, 0
      %p201 = por %p199, %p200
      %p202 = scmp.le.s32.totalorder 1, %s16
      %p203 = scmp.lt.s32.totalorder %s16, 3
      %p204 = pnand %p202, %p203
      %p205 = pneg %p204
      // Predicated region
      $region9: #{tpu_custom_call.1} parent=5 // pred_check
        _
      $region10: #{tpu_custom_call.1} parent=5 // pred_check_branch
        %207 = sbr.rel (%p204) target = $region12
      $region11: #{tpu_custom_call.1} parent=5 // pred_region
        %s208 = ssub.s32 %s16, 1
        // Predicated region
        $region13: #{tpu_custom_call.1} parent=11 // pred_check
          %p209 = pneg %p63
        $region14: #{tpu_custom_call.1} parent=11 // pred_check_branch
          %211 = sbr.rel (%p209) target = $region16
        $region15: #{tpu_custom_call.1} parent=11 // pred_region
          _
        $region16: #{tpu_custom_call.1} parent=11 // pred_fallthru
          _
        // Predicated region
        $region17: #{tpu_custom_call.1} parent=11 // pred_check
          %p212 = pneg %p84
        $region18: #{tpu_custom_call.1} parent=11 // pred_check_branch
          %214 = sbr.rel (%p212) target = $region20
        $region19: #{tpu_custom_call.1} parent=11 // pred_region
          _
        $region20: #{tpu_custom_call.1} parent=11 // pred_fallthru
          _
        // Predicated region
        $region21: #{tpu_custom_call.1} parent=11 // pred_check
          %p215 = pneg %p105
        $region22: #{tpu_custom_call.1} parent=11 // pred_check_branch
          %217 = sbr.rel (%p215) target = $region24
        $region23: #{tpu_custom_call.1} parent=11 // pred_region
          _
        $region24: #{tpu_custom_call.1} parent=11 // pred_fallthru
          _
        // Predicated region
        $region25: #{tpu_custom_call.1} parent=11 // pred_check
          %p218 = pneg %p126
        $region26: #{tpu_custom_call.1} parent=11 // pred_check_branch
          %220 = sbr.rel (%p218) target = $region28
        $region27: #{tpu_custom_call.1} parent=11 // pred_region
          _
        $region28: #{tpu_custom_call.1} parent=11 // pred_fallthru
          _
        // Predicated region
        $region29: #{tpu_custom_call.1} parent=11 // pred_check
          %p221 = pneg %p147
        $region30: #{tpu_custom_call.1} parent=11 // pred_check_branch
          %223 = sbr.rel (%p221) target = $region32
        $region31: #{tpu_custom_call.1} parent=11 // pred_region
          _
        $region32: #{tpu_custom_call.1} parent=11 // pred_fallthru
          _
        // Predicated region
        $region33: #{tpu_custom_call.1} parent=11 // pred_check
          %p224 = pneg %p168
        $region34: #{tpu_custom_call.1} parent=11 // pred_check_branch
          %226 = sbr.rel (%p224) target = $region36
        $region35: #{tpu_custom_call.1} parent=11 // pred_region
          _
        $region36: #{tpu_custom_call.1} parent=11 // pred_fallthru
          _
      $region12: #{tpu_custom_call.1} parent=5 // pred_fallthru
        _
      %p227 = scmp.lt.s32.totalorder %s16, 2
      // Predicated region
      $region37: #{tpu_custom_call.1} parent=5 // pred_check
        %p228 = pneg %p227
      $region38: #{tpu_custom_call.1} parent=5 // pred_check_branch
        %230 = sbr.rel (%p228) target = $region40
      $region39: #{tpu_custom_call.1} parent=5 // pred_region
        // Predicated region
        $region41: #{tpu_custom_call.1} parent=39 // pred_check
          %p231 = pneg %p36
        $region42: #{tpu_custom_call.1} parent=39 // pred_check_branch
          %233 = sbr.rel (%p231) target = $region44
        $region43: #{tpu_custom_call.1} parent=39 // pred_region
          %p234 = scmp.lt.s32.totalorder %s16, 1
          %s235 = scalar_select %p234, %s16, 1
          %s236 = smul.addr %s235, 8
          %s237 = scalar_lea.vmem %s0, %s236
        $region44: #{tpu_custom_call.1} parent=39 // pred_fallthru
          _
      $region40: #{tpu_custom_call.1} parent=5 // pred_fallthru
        _
      %p238 = scmp.le.s32.totalorder 1, %s16
      %p239 = scmp.lt.s32.totalorder %s16, 3
      %p240 = pnand %p238, %p239
      %p241 = pneg %p240
      // Predicated region
      $region45: #{tpu_custom_call.1} parent=5 // pred_check
        _
      $region46: #{tpu_custom_call.1} parent=5 // pred_check_branch
        %243 = sbr.rel (%p240) target = $region48
      $region47: #{tpu_custom_call.1} parent=5 // pred_region
        %s244 = ssub.s32 %s16, 1
        %p245 = scmp.lt.s32.totalorder %s21, 1
        %s246 = scalar_select %p245, %s21, 1
        %s247 = smul.addr %s246, 8
        %s248 = scalar_lea.vmem %s0, %s247
        %p249 = pneg %p42
        %p250 = pneg %p39
        %p251 = pneg %p63
        %p252 = pneg %p60
        %p253 = pneg %p84
        %p254 = pneg %p81
        %p255 = pneg %p105
        %p256 = pneg %p102
        %p257 = pneg %p126
        %p258 = pneg %p123
        %p259 = pneg %p147
        %p260 = pneg %p144
        %p261 = pneg %p168
        %p262 = pneg %p165
        %p263 = pneg %p194
        %p264 = pneg %p191
        %s265 = sand.u32 %s181, 1
        %s266 = scalar_lea.sflag [#allocation3], %s265
        %s267 = sand.u32 %s181, 1
        %s268 = smul.addr %s267, 8
        %s269 = scalar_lea.vmem [#allocation2], %s268
        %p270 = scmp.lt.s32.totalorder %s21, 1
        %s271 = scalar_select %p270, %s21, 1
        %s272 = smul.addr %s271, 8
        %s273 = scalar_lea.vmem %s0, %s272
        %v275 = vld [vmem:[%s273] sm:$0xff]
        %v276 = vld [vmem:[%s1] sm:$0x1]
        %v277 = vld [vmem:[%s2] sm:$0x1]
        %vm278 = vcmask 261120
        %v279 = vsel %vm278, %v275, 0.0
        %280 = vadd.xlane.f32.xlu0 %v279
        %v281 = vpop.xlane.xlu0 %280
        %v282 = vrcp.pop 32.0
        %v283 = vmul.f32 %v281, %v282
        %v284 = vsub.f32 %v275, %v283
        %v285 = vmul.f32 %v284, %v284
        %v286 = vsel %vm278, %v285, 0.0
        %287 = vadd.xlane.f32.xlu0 %v286
        %v288 = vpop.xlane.xlu0 %287
        %v289 = vmul.f32 %v288, %v282
        %v290 = vadd.f32 %v289, 1e-12
        %v291 = vrsqrt.pop %v290
        %v292 = vmul.f32 %v284, %v291
        %v294 = vlaneseq
        %v295 = vshrl.u32 %v294, 7
        %v296 = vsub.s32 0, %v295
        %v297 = vrot.slane %v276, %v296
        %v299 = vmul.f32 %v292, %v297
        %v301 = vlaneseq
        %v302 = vshrl.u32 %v301, 7
        %v303 = vsub.s32 0, %v302
        %v304 = vrot.slane %v277, %v303
        %v306 = vadd.f32 %v299, %v304
        %v307 = vld [vmem:[%s3] sm:$0xf]
        %v308 = vld [vmem:[%s3 + $0x4] sm:$0xf]
        %v309 = vld [vmem:[%s3 + $0x8] sm:$0xf]
        %v310 = vld [vmem:[%s3 + $0xc] sm:$0xf]
        %v311 = vld [vmem:[%s4] sm:$0x1]
        %v312 = vld [vmem:[%s5] sm:$0xf]
        %v313 = vld [vmem:[%s5 + $0x4] sm:$0xf]
        %v314 = vld [vmem:[%s5 + $0x8] sm:$0xf]
        %v315 = vld [vmem:[%s5 + $0xc] sm:$0xf]
        %v316 = vld [vmem:[%s5 + $0x10] sm:$0xf]
        %v317 = vld [vmem:[%s5 + $0x14] sm:$0xf]
        %v318 = vld [vmem:[%s5 + $0x18] sm:$0xf]
        %v319 = vld [vmem:[%s5 + $0x1c] sm:$0xf]
        %v320 = vld [vmem:[%s5 + $0x20] sm:$0xf]
        %v321 = vld [vmem:[%s5 + $0x24] sm:$0xf]
        %v322 = vld [vmem:[%s5 + $0x28] sm:$0xf]
        %v323 = vld [vmem:[%s5 + $0x2c] sm:$0xf]
        %v324 = vld [vmem:[%s5 + $0x30] sm:$0xf]
        %v325 = vld [vmem:[%s5 + $0x34] sm:$0xf]
        %v326 = vld [vmem:[%s5 + $0x38] sm:$0xf]
        %v327 = vld [vmem:[%s5 + $0x3c] sm:$0xf]
        %v328 = vld [vmem:[%s6] sm:$0x1]
        %v329 = vpack.c.bf16 %v306, %v306
        %v331 = vlaneseq
        %v332 = vshrl.u32 %v331, 7
        %v333 = vsub.s32 0, %v332
        %v334 = vrot.slane %v311, %v333
        %v340 = vunpack.c.l.b16 %v307
        %v341 = vunpack.c.l.b16 %v308
        %v342 = vunpack.c.l.b16 %v309
        %v343 = vunpack.c.l.b16 %v310
        %v344 = vpack.c.b16 %v341, %v340
        %v345 = vpack.c.b16 %v343, %v342
        %v349 = vsel %vm278, %v329, 0
        %351 = vmatprep.subr.bf16.mxu0 0
        %352 = vmatpush1.bf16.msra.mxu0 %v344
        %353 = vmatprep.subr.bf16.mxu0 0
        %354 = vmatpush1.bf16.msra.mxu0 %v345
        %355 = vmatprep.subr.bf16.mxu0 0
        %356 = vmatpush1.bf16.msra.mxu0 0
        %357 = vmatprep.subr.bf16.mxu0 0
        %358 = vmatpush1.bf16.msra.mxu0 0
        %359 = vmatprep.subr.bf16.mxu0 0
        %360 = vmatpush1.bf16.msra.mxu0 0
        %361 = vmatprep.subr.bf16.mxu0 0
        %362 = vmatpush1.bf16.msra.mxu0 0
        %363 = vmatprep.subr.bf16.mxu0 0
        %364 = vmatpush1.bf16.msra.mxu0 0
        %365 = vmatprep.subr.bf16.mxu0 0
        %366 = vmatpush1.bf16.msra.mxu0 0
        %367 = vmatprep.subr.bf16.mxu0 0
        %368 = vmatpush1.bf16.msra.mxu0 0
        %369 = vmatprep.subr.bf16.mxu0 0
        %370 = vmatpush1.bf16.msra.mxu0 0
        %371 = vmatprep.subr.bf16.mxu0 0
        %372 = vmatpush1.bf16.msra.mxu0 0
        %373 = vmatprep.subr.bf16.mxu0 0
        %374 = vmatpush1.bf16.msra.mxu0 0
        %375 = vmatprep.subr.bf16.mxu0 0
        %376 = vmatpush1.bf16.msra.mxu0 0
        %377 = vmatprep.subr.bf16.mxu0 0
        %378 = vmatpush1.bf16.msra.mxu0 0
        %379 = vmatprep.subr.bf16.mxu0 0
        %380 = vmatpush1.bf16.msra.mxu0 0
        %381 = vmatprep.subr.bf16.mxu0 0
        %382 = vmatpush1.bf16.msra.mxu0 0
        %383 = vmatprep.mubr.bf16.mxu0 0
        %384 = vmatmul.mubr.bf16.gmra.mrb[0].mxu0 %v349
        %v385 = vpop.f32.mrb[0].mxu0
        %v386 = vadd.f32 %v334, %v385
        %v387 = vpop.f32.mrb[0].mxu0
        %v388 = vpop.f32.mrb[0].mxu0
        %v389 = vpop.f32.mrb[0].mxu0
        %390 = vdwg.mxu0
        %v391 = vmul.f32 %v386, %v386
        %v392 = vmul.f32 %v386, %v391
        %v393 = vmul.f32 %v392, 0.044715
        %v394 = vadd.f32 %v386, %v393
        %v395 = vmul.f32 %v394, 0.7978846
        %v396 = vtanh.pop %v395
        %v397 = vadd.f32 %v396, 1.0
        %v398 = vmul.f32 %v397, 0.5
        %v399 = vmul.f32 %v386, %v398
        %v400 = vpack.c.bf16 %v399, %v399
        %v402 = vlaneseq
        %v403 = vshrl.u32 %v402, 7
        %v404 = vsub.s32 0, %v403
        %v405 = vrot.slane %v328, %v404
        %v423 = vunpack.c.l.b16 %v312
        %v424 = vunpack.c.l.b16 %v313
        %v425 = vunpack.c.l.b16 %v314
        %v426 = vunpack.c.l.b16 %v315
        %v427 = vunpack.c.l.b16 %v316
        %v428 = vunpack.c.l.b16 %v317
        %v429 = vunpack.c.l.b16 %v318
        %v430 = vunpack.c.l.b16 %v319
        %v431 = vunpack.c.l.b16 %v320
        %v432 = vunpack.c.l.b16 %v321
        %v433 = vunpack.c.l.b16 %v322
        %v434 = vunpack.c.l.b16 %v323
        %v435 = vunpack.c.l.b16 %v324
        %v436 = vunpack.c.l.b16 %v325
        %v437 = vunpack.c.l.b16 %v326
        %v438 = vunpack.c.l.b16 %v327
        %v439 = vpack.c.b16 %v424, %v423
        %v440 = vpack.c.b16 %v426, %v425
        %v441 = vpack.c.b16 %v428, %v427
        %v442 = vpack.c.b16 %v430, %v429
        %v443 = vpack.c.b16 %v432, %v431
        %v444 = vpack.c.b16 %v434, %v433
        %v445 = vpack.c.b16 %v436, %v435
        %v446 = vpack.c.b16 %v438, %v437
        %455 = vmatprep.subr.bf16.mxu0 0
        %456 = vmatpush1.bf16.msra.mxu0 %v439
        %457 = vmatprep.subr.bf16.mxu0 0
        %458 = vmatpush1.bf16.msra.mxu0 %v440
        %459 = vmatprep.subr.bf16.mxu0 0
        %460 = vmatpush1.bf16.msra.mxu0 %v441
        %461 = vmatprep.subr.bf16.mxu0 0
        %462 = vmatpush1.bf16.msra.mxu0 %v442
        %463 = vmatprep.subr.bf16.mxu0 0
        %464 = vmatpush1.bf16.msra.mxu0 %v443
        %465 = vmatprep.subr.bf16.mxu0 0
        %466 = vmatpush1.bf16.msra.mxu0 %v444
        %467 = vmatprep.subr.bf16.mxu0 0
        %468 = vmatpush1.bf16.msra.mxu0 %v445
        %469 = vmatprep.subr.bf16.mxu0 0
        %470 = vmatpush1.bf16.msra.mxu0 %v446
        %471 = vmatprep.subr.bf16.mxu0 0
        %472 = vmatpush1.bf16.msra.mxu0 0
        %473 = vmatprep.subr.bf16.mxu0 0
        %474 = vmatpush1.bf16.msra.mxu0 0
        %475 = vmatprep.subr.bf16.mxu0 0
        %476 = vmatpush1.bf16.msra.mxu0 0
        %477 = vmatprep.subr.bf16.mxu0 0
        %478 = vmatpush1.bf16.msra.mxu0 0
        %479 = vmatprep.subr.bf16.mxu0 0
        %480 = vmatpush1.bf16.msra.mxu0 0
        %481 = vmatprep.subr.bf16.mxu0 0
        %482 = vmatpush1.bf16.msra.mxu0 0
        %483 = vmatprep.subr.bf16.mxu0 0
        %484 = vmatpush1.bf16.msra.mxu0 0
        %485 = vmatprep.subr.bf16.mxu0 0
        %486 = vmatpush1.bf16.msra.mxu0 0
        %487 = vmatprep.mubr.bf16.mxu0 0
        %488 = vmatmul.mubr.bf16.gmra.mrb[0].mxu0 %v400
        %v489 = vpop.f32.mrb[0].mxu0
        %v490 = vadd.f32 %v405, %v489
        %v491 = vpop.f32.mrb[0].mxu0
        %v492 = vpop.f32.mrb[0].mxu0
        %v493 = vpop.f32.mrb[0].mxu0
        %494 = vdwg.mxu0
        %v495 = vadd.f32 %v275, %v490
        %496 = vst.msk [vmem:[%s269] sm:$0xff] %vm278, %v495
        %s497 = sand.u32 %s181, 1
        %s498 = scalar_lea.sflag [#allocation3], %s497
        %s499 = sand.u32 %s181, 1
        %s500 = smul.addr %s499, 8
        %s501 = scalar_lea.vmem [#allocation2], %s500
        // Predicated region
        $region49: #{tpu_custom_call.1} parent=47 // pred_check
          %p502 = pneg %p191
        $region50: #{tpu_custom_call.1} parent=47 // pred_check_branch
          %504 = sbr.rel (%p502) target = $region52
        $region51: #{tpu_custom_call.1} parent=47 // pred_region
          %s506 = ssub.s32 128, 128
          %507 = vsyncadd %s498, %s506
          %s508 = smul.addr %s21, 128
          %s509 = scalar_lea.hbm %s7, %s508
          %s511 = sshll.u32 %s501, 4
          %s512 = int_to_ptr.vmem [resolvable:$true] %s511
          %514 = dma.vmem_to_hbm [thread:$0]  %s512, 128, %s509, %s498
        $region52: #{tpu_custom_call.1} parent=47 // pred_fallthru
          _
      $region48: #{tpu_custom_call.1} parent=5 // pred_fallthru
        _
      %p515 = scmp.le.s32.totalorder 2, %s16
      // Predicated region
      $region53: #{tpu_custom_call.1} parent=5 // pred_check
        %p516 = pneg %p515
      $region54: #{tpu_custom_call.1} parent=5 // pred_check_branch
        %518 = sbr.rel (%p516) target = $region56
      $region55: #{tpu_custom_call.1} parent=5 // pred_region
        %s519 = ssub.s32 %s16, 2
        // Predicated region
        $region57: #{tpu_custom_call.1} parent=55 // pred_check
          %p520 = pneg %p197
        $region58: #{tpu_custom_call.1} parent=55 // pred_check_branch
          %522 = sbr.rel (%p520) target = $region60
        $region59: #{tpu_custom_call.1} parent=55 // pred_region
          %s523 = sand.u32 %s182, 1
          %s524 = scalar_lea.sflag [#allocation3], %s523
          %s525 = sand.u32 %s182, 1
          %s526 = smul.addr %s525, 8
          %s527 = scalar_lea.vmem [#allocation2], %s526
          %528 = dma.done %s524, 128
        $region60: #{tpu_custom_call.1} parent=55 // pred_fallthru
          _
      $region56: #{tpu_custom_call.1} parent=5 // pred_fallthru
        _
    $region6: #{tpu_custom_call.1} parent=1 // loop_footer
      %s20 = sadd.s32 1, %s16
    $region7: #{tpu_custom_call.1} parent=1 // loop_footer_branch
      %15 = sbr.rel target = $region3
    $region8: #{tpu_custom_call.1} parent=1 // loop_exit
      _
    %529 = vsyncpa [#allocation3], 1
    %s530 = scalar_lea.sflag [#allocation3], 1
    %531 = vsyncpa %s530, 1

</llo_original>
